<compile_context>
chip_gen: v7x
topology: tpu7x:2x2x1
jax: 0.10.0
libtpu: 0.0.40
codegen_flags: <defaults>
</compile_context>

<pallas_src>
import functools
import math

import jax
import jax.numpy as jnp
from jax.experimental import pallas as pl
from jax.experimental.pallas import tpu as pltpu


def _round_up(x, m):
    return (x + m - 1) // m * m


def _fused_mlb_kernel(*refs, num_layers):
    """Fused MLB forward.

    refs = (x_ref, w_0, neuro_0, w_1, neuro_1, ..., w_{L-1}, neuro_{L-1}, o_ref)

    x_ref      : (tm, K0p)  padded input batch tile
    w_l        : (Kp_l, Np_l) effective weights (sigmoid already folded in for
                 non-embedding layers), zero padded
    neuro_l    : (1, Np_l) neurotransmitter row, zero padded
    o_ref      : (tm, NLp) padded output tile
    """
    x_ref = refs[0]
    o_ref = refs[-1]

    h = x_ref[...]
    for l in range(num_layers):
        w = refs[1 + 2 * l][...]          # resident in VMEM for the whole call
        neuro = refs[2 + 2 * l][...]
        acc = jnp.dot(h, w, preferred_element_type=jnp.float32)
        # Padded lanes: acc == 0 there, sigmoid(0) * neuro(=0) == 0, so padding
        # stays exactly zero and never pollutes the next layer.
        h = jax.nn.sigmoid(acc) * neuro
    o_ref[...] = h.astype(o_ref.dtype)


class MLB:
    """JAX/Pallas port of the PyTorch MLB module (sequential BIN layers)."""

    def __init__(self, sizes):
        self.sizes = sizes
        self.layers = []        # raw (torch-layout) params, used by the reference
        self._padded = []       # hoisted, kernel-ready params
        self._forward_fn = None

    def initialize(self, input_size, key):
        dims = [input_size] + list(self.sizes)
        keys = jax.random.split(key, len(dims) - 1)
        self.layers = []
        padded = []
        for i in range(len(dims) - 1):
            fan_in, fan_out = dims[i], dims[i + 1]
            # torch.nn.init.kaiming_uniform_(W, a=sqrt(5)) on (out,in):
            # bound = sqrt(6 / ((1 + a^2) * fan_in)) = 1 / sqrt(fan_in)
            bound = 1.0 / math.sqrt(fan_in)
            w = jax.random.uniform(
                keys[i], (fan_out, fan_in), jnp.float32, -bound, bound)
            neuro = jnp.ones((fan_out,), jnp.float32).at[fan_out // 2:].set(-1.0)
            is_embed = (i == 0)
            self.layers.append(dict(w=w, neuro=neuro, is_embed=is_embed))

            # --- hoisted weight prep (once at init, not per forward) ---
            #   * transpose to (in, out) so the kernel does x @ W,
            #   * fold sigmoid(W) for non-embedding layers (inference-time fold),
            #   * zero-pad to (8,128)-friendly tiles.
            # TODO(synk): if weights are trained, re-run this prep after each
            # update (or move sigmoid(W) back into the kernel, applied once per
            # weight, not per batch tile).
            w_eff = w if is_embed else jax.nn.sigmoid(w)
            kp = _round_up(fan_in, 128)
            np_ = _round_up(fan_out, 128)
            wp = jnp.zeros((kp, np_), jnp.float32).at[:fan_in, :fan_out].set(w_eff.T)
            nrp = jnp.zeros((1, np_), jnp.float32).at[0, :fan_out].set(neuro)
            padded.append((wp, nrp))

        self._padded = padded
        self._in_dim = input_size
        self._out_dim = dims[-1]
        self._build_forward()
        return dims[-1]

    def _build_forward(self):
        num_layers = len(self._padded)
        k0p = self._padded[0][0].shape[0]
        nlp = self._padded[-1][0].shape[1]
        out_dim = self._out_dim

        # NOTE: all padded weights together must fit comfortably in VMEM
        # (trivially true at MLB scales: a few KB-MB, well under v7x's 64 MiB).

        def fwd(x, *flat_params):
            M, K = x.shape
            Mp = _round_up(M, 8)
            tm = Mp if Mp <= 128 else 128      # one batch tile per grid step
            Mp = _round_up(Mp, tm)
            xp = jnp.zeros((Mp, k0p), jnp.float32).at[:M, :K].set(
                x.astype(jnp.float32))

            in_specs = [pl.BlockSpec((tm, k0p), lambda i: (i, 0))]
            for l in range(num_layers):
                wp, nrp = flat_params[2 * l], flat_params[2 * l + 1]
                # Full-array blocks: weights/neuro stay resident in VMEM and are
                # not re-fetched across consecutive (identical-index) grid steps.
                in_specs.append(pl.BlockSpec(wp.shape, lambda i: (0, 0)))
                in_specs.append(pl.BlockSpec(nrp.shape, lambda i: (0, 0)))

            out = pl.pallas_call(
                functools.partial(_fused_mlb_kernel, num_layers=num_layers),
                out_shape=jax.ShapeDtypeStruct((Mp, nlp), jnp.float32),
                grid_spec=pltpu.PrefetchScalarGridSpec(
                    num_scalar_prefetch=0,
                    grid=(Mp // tm,),
                    in_specs=in_specs,
                    out_specs=pl.BlockSpec((tm, nlp), lambda i: (i, 0)),
                ),
                compiler_params=pltpu.CompilerParams(
                    dimension_semantics=("parallel",)),
            )(xp, *flat_params)
            return out[:M, :out_dim]

        self._forward_fn = jax.jit(fwd)

    def forward(self, x):
        flat = [a for pair in self._padded for a in pair]
        return self._forward_fn(x, *flat)


def reference_forward(layers, x):
    """Pure-JAX reference matching the PyTorch forward exactly."""
    for layer in layers:
        w = layer["w"] if layer["is_embed"] else jax.nn.sigmoid(layer["w"])
        x = jax.nn.sigmoid(x @ w.T) * layer["neuro"]
    return x


if __name__ == "__main__":
    key = jax.random.PRNGKey(0)
    k_params, k_x = jax.random.split(key)

    batch, input_size = 4, 32
    sizes = (64, 16)

    mlb = MLB(sizes)
    mlb.initialize(input_size, k_params)

    x = jax.random.normal(k_x, (batch, input_size), jnp.float32)

    out = jax.block_until_ready(mlb.forward(x))
    ref = reference_forward(mlb.layers, x)

    assert out.shape == (batch, sizes[-1])
    assert jnp.allclose(out, ref, atol=1e-5, rtol=1e-5)

    print("KERNEL_OK")
</pallas_src>

<mosaic_0001>
module attributes {stable_mosaic.version = 11 : i64} {
  func.func @_fused_mlb_kernel(%arg0: i32, %arg1: memref<8x128xf32, #tpu.memory_space<vmem>>, %arg2: memref<128x128xf32, #tpu.memory_space<vmem>>, %arg3: memref<1x128xf32, #tpu.memory_space<vmem>>, %arg4: memref<128x128xf32, #tpu.memory_space<vmem>>, %arg5: memref<1x128xf32, #tpu.memory_space<vmem>>, %arg6: memref<8x128xf32, #tpu.memory_space<vmem>>) attributes {dimension_semantics = [#tpu.dimension_semantics<parallel>], iteration_bounds = array<i64: 1>, scalar_prefetch = 0 : i64, scratch_operands = 0 : i64, tpu.core_type = #tpu.core_type<tc>, window_params = [{transform_indices = @transform_0, window_bounds = array<i64: 8, 128>}, {pipeline_mode = #tpu.pipeline_mode<synchronous>, transform_indices = @transform_1, window_bounds = array<i64: 128, 128>}, {pipeline_mode = #tpu.pipeline_mode<synchronous>, transform_indices = @transform_2, window_bounds = array<i64: 1, 128>}, {pipeline_mode = #tpu.pipeline_mode<synchronous>, transform_indices = @transform_3, window_bounds = array<i64: 128, 128>}, {pipeline_mode = #tpu.pipeline_mode<synchronous>, transform_indices = @transform_4, window_bounds = array<i64: 1, 128>}, {transform_indices = @transform_5, window_bounds = array<i64: 8, 128>}]} {
    %c0 = arith.constant 0 : index
    %c0_0 = arith.constant 0 : index
    %0 = vector.load %arg1[%c0, %c0_0] : memref<8x128xf32, #tpu.memory_space<vmem>>, vector<8x128xf32>
    %c0_1 = arith.constant 0 : index
    %c0_2 = arith.constant 0 : index
    %1 = vector.load %arg2[%c0_1, %c0_2] : memref<128x128xf32, #tpu.memory_space<vmem>>, vector<128x128xf32>
    %c0_3 = arith.constant 0 : index
    %c0_4 = arith.constant 0 : index
    %2 = vector.load %arg3[%c0_3, %c0_4] : memref<1x128xf32, #tpu.memory_space<vmem>>, vector<1x128xf32>
    %cst = arith.constant dense<0.000000e+00> : vector<8x128xf32>
    %3 = tpu.matmul %0, %1, %cst {dimension_numbers = #tpu.dot_dimension_numbers<[1], [0], [0], [1], [0, 0, 1, 1], [], []>} : vector<8x128xf32>, vector<128x128xf32>, vector<8x128xf32> -> vector<8x128xf32>
    %4 = arith.negf %3 : vector<8x128xf32>
    %5 = math.exp %4 : vector<8x128xf32>
    %cst_5 = arith.constant 1.000000e+00 : f32
    %6 = vector.broadcast %cst_5 : f32 to vector<8x128xf32>
    %7 = arith.addf %6, %5 : vector<8x128xf32>
    %8 = arith.divf %6, %7 : vector<8x128xf32>
    %9 = vector.broadcast %2 : vector<1x128xf32> to vector<8x128xf32>
    %10 = arith.mulf %8, %9 : vector<8x128xf32>
    %c0_6 = arith.constant 0 : index
    %c0_7 = arith.constant 0 : index
    %11 = vector.load %arg4[%c0_6, %c0_7] : memref<128x128xf32, #tpu.memory_space<vmem>>, vector<128x128xf32>
    %c0_8 = arith.constant 0 : index
    %c0_9 = arith.constant 0 : index
    %12 = vector.load %arg5[%c0_8, %c0_9] : memref<1x128xf32, #tpu.memory_space<vmem>>, vector<1x128xf32>
    %cst_10 = arith.constant dense<0.000000e+00> : vector<8x128xf32>
    %13 = tpu.matmul %10, %11, %cst_10 {dimension_numbers = #tpu.dot_dimension_numbers<[1], [0], [0], [1], [0, 0, 1, 1], [], []>} : vector<8x128xf32>, vector<128x128xf32>, vector<8x128xf32> -> vector<8x128xf32>
    %14 = arith.negf %13 : vector<8x128xf32>
    %15 = math.exp %14 : vector<8x128xf32>
    %cst_11 = arith.constant 1.000000e+00 : f32
    %16 = vector.broadcast %cst_11 : f32 to vector<8x128xf32>
    %17 = arith.addf %16, %15 : vector<8x128xf32>
    %18 = arith.divf %16, %17 : vector<8x128xf32>
    %19 = vector.broadcast %12 : vector<1x128xf32> to vector<8x128xf32>
    %20 = arith.mulf %18, %19 : vector<8x128xf32>
    %c0_12 = arith.constant 0 : index
    %c0_13 = arith.constant 0 : index
    %21 = vector.load %arg6[%c0_12, %c0_13] : memref<8x128xf32, #tpu.memory_space<vmem>>, vector<8x128xf32>
    tpu.vector_store %arg6[%c0_12, %c0_13], %20 {strides = array<i32>} : memref<8x128xf32, #tpu.memory_space<vmem>>, vector<8x128xf32>,
    return
  }
  func.func @transform_0(%arg0: i32) -> (i32, i32) {
    %c0_i32 = arith.constant 0 : i32
    %c0_i32_0 = arith.constant 0 : i32
    return %arg0, %c0_i32 : i32, i32
  }
  func.func @transform_1(%arg0: i32) -> (i32, i32) {
    %c0_i32 = arith.constant 0 : i32
    %c0_i32_0 = arith.constant 0 : i32
    %c0_i32_1 = arith.constant 0 : i32
    return %c0_i32, %c0_i32_0 : i32, i32
  }
  func.func @transform_2(%arg0: i32) -> (i32, i32) {
    %c0_i32 = arith.constant 0 : i32
    %c0_i32_0 = arith.constant 0 : i32
    %c0_i32_1 = arith.constant 0 : i32
    return %c0_i32, %c0_i32_0 : i32, i32
  }
  func.func @transform_3(%arg0: i32) -> (i32, i32) {
    %c0_i32 = arith.constant 0 : i32
    %c0_i32_0 = arith.constant 0 : i32
    %c0_i32_1 = arith.constant 0 : i32
    return %c0_i32, %c0_i32_0 : i32, i32
  }
  func.func @transform_4(%arg0: i32) -> (i32, i32) {
    %c0_i32 = arith.constant 0 : i32
    %c0_i32_0 = arith.constant 0 : i32
    %c0_i32_1 = arith.constant 0 : i32
    return %c0_i32, %c0_i32_0 : i32, i32
  }
  func.func @transform_5(%arg0: i32) -> (i32, i32) {
    %c0_i32 = arith.constant 0 : i32
    %c0_i32_0 = arith.constant 0 : i32
    return %arg0, %c0_i32 : i32, i32
  }
}

</mosaic_0001>

<llo_original>
// kernel: fwd.1
$region0: #{fwd.1}
  #allocation0 [shape = 'u32[]', space=smem, size = 0x4, offset = 0x4, fixed_abs, tag = 'smem constant byte address 0x4 - core index']
  #allocation1 [shape = 'u32[144,128]{1,0:T(1,128)}', space=vmem, size = 0x12000, scoped, tag = 'internal scratch']
  %s0 = inlined_call_operand.vmem [shape: f32[8,128], index: 0, kind: input, shape index: {}]
  %s1 = inlined_call_operand.hbm [shape: f32[128,128], index: 1, kind: input, shape index: {}]
  %s2 = inlined_call_operand.vmem [shape: f32[1,128], index: 2, kind: input, shape index: {}]
  %s3 = inlined_call_operand.hbm [shape: f32[128,128], index: 3, kind: input, shape index: {}]
  %s4 = inlined_call_operand.vmem [shape: f32[1,128], index: 4, kind: input, shape index: {}]
  %s5 = inlined_call_operand.vmem [shape: f32[8,128], index: 5, kind: output, shape index: {}]
  %s6 = sld [smem:[#allocation0]]
  $region38: #{fwd.1} parent=0
    _
  %s8 = ssub.s32 1, %s6
  %s9 = scalar_select 0, %s8, %s6
  $region1: #{fwd.1} parent=0
    #allocation2 [shape = 'u8[65536]{0}', space=vmem, size = 0x10000, scoped, tag = 'input window, operand 1, single buffered']
    #allocation3 [shape = 's32[1]{0}', space=sflag, size = 0x4, scoped, tag = 'scoped memory for fwd.1']
    #allocation4 [shape = 'u8[65536]{0}', space=vmem, size = 0x10000, scoped, tag = 'input window, operand 3, single buffered']
    #allocation5 [shape = 's32[1]{0}', space=sflag, size = 0x4, scoped, tag = 'scoped memory for fwd.1']
    %10 = vsyncpa [#allocation3], 0
    %11 = vsyncpa [#allocation5], 0
    // Predicated region
    $region2: #{fwd.1} parent=1 // pred_check
      _
    $region3: #{fwd.1} parent=1 // pred_check_branch
      %13 = sbr.rel (0) target = $region5
    $region4: #{fwd.1} parent=1 // pred_region
      _
    $region5: #{fwd.1} parent=1 // pred_fallthru
      _
    // Predicated region
    $region6: #{fwd.1} parent=1 // pred_check
      _
    $region7: #{fwd.1} parent=1 // pred_check_branch
      %15 = sbr.rel (0) target = $region9
    $region8: #{fwd.1} parent=1 // pred_region
      %s17 = ssub.s32 2048, 2048
      %18 = vsyncadd [#allocation3], %s17
      %s19 = sshll.u32 [#allocation2], 4
      %s20 = int_to_ptr.vmem [resolvable:$true] %s19
      %25 = dma.hbm_to_vmem [thread:$0]  %s1, 2048, %s20, [#allocation3], 128, 128, 8
    $region9: #{fwd.1} parent=1 // pred_fallthru
      _
    // Predicated region
    $region10: #{fwd.1} parent=1 // pred_check
      _
    $region11: #{fwd.1} parent=1 // pred_check_branch
      %27 = sbr.rel (0) target = $region13
    $region12: #{fwd.1} parent=1 // pred_region
      _
    $region13: #{fwd.1} parent=1 // pred_fallthru
      _
    // Predicated region
    $region14: #{fwd.1} parent=1 // pred_check
      _
    $region15: #{fwd.1} parent=1 // pred_check_branch
      %29 = sbr.rel (0) target = $region17
    $region16: #{fwd.1} parent=1 // pred_region
      %s31 = ssub.s32 2048, 2048
      %32 = vsyncadd [#allocation5], %s31
      %s33 = sshll.u32 [#allocation4], 4
      %s34 = int_to_ptr.vmem [resolvable:$true] %s33
      %39 = dma.hbm_to_vmem [thread:$0]  %s3, 2048, %s34, [#allocation5], 128, 128, 8
    $region17: #{fwd.1} parent=1 // pred_fallthru
      _
    // Predicated region
    $region18: #{fwd.1} parent=1 // pred_check
      _
    $region19: #{fwd.1} parent=1 // pred_check_branch
      %41 = sbr.rel (0) target = $region21
    $region20: #{fwd.1} parent=1 // pred_region
      _
    $region21: #{fwd.1} parent=1 // pred_fallthru
      _
    // Predicated region
    $region22: #{fwd.1} parent=1 // pred_check
      _
    $region23: #{fwd.1} parent=1 // pred_check_branch
      %43 = sbr.rel (0) target = $region25
    $region24: #{fwd.1} parent=1 // pred_region
      %44 = dma.done [#allocation3], 2048
    $region25: #{fwd.1} parent=1 // pred_fallthru
      _
    // Predicated region
    $region26: #{fwd.1} parent=1 // pred_check
      _
    $region27: #{fwd.1} parent=1 // pred_check_branch
      %46 = sbr.rel (0) target = $region29
    $region28: #{fwd.1} parent=1 // pred_region
      %47 = dma.done [#allocation5], 2048
    $region29: #{fwd.1} parent=1 // pred_fallthru
      _
    %v48 = vld [vmem:[%s0] sm:$0xff]
    %v49 = vld [vmem:[#allocation2] sm:$0xff]
    %v50 = vld [vmem:[#allocation2 + $0x8] sm:$0xff]
    %v51 = vld [vmem:[#allocation2 + $0x10] sm:$0xff]
    %v52 = vld [vmem:[#allocation2 + $0x18] sm:$0xff]
    %v53 = vld [vmem:[#allocation2 + $0x20] sm:$0xff]
    %v54 = vld [vmem:[#allocation2 + $0x28] sm:$0xff]
    %v55 = vld [vmem:[#allocation2 + $0x30] sm:$0xff]
    %v56 = vld [vmem:[#allocation2 + $0x38] sm:$0xff]
    %v57 = vld [vmem:[#allocation2 + $0x40] sm:$0xff]
    %v58 = vld [vmem:[#allocation2 + $0x48] sm:$0xff]
    %v59 = vld [vmem:[#allocation2 + $0x50] sm:$0xff]
    %v60 = vld [vmem:[#allocation2 + $0x58] sm:$0xff]
    %v61 = vld [vmem:[#allocation2 + $0x60] sm:$0xff]
    %v62 = vld [vmem:[#allocation2 + $0x68] sm:$0xff]
    %v63 = vld [vmem:[#allocation2 + $0x70] sm:$0xff]
    %v64 = vld [vmem:[#allocation2 + $0x78] sm:$0xff]
    %v65 = vld [vmem:[%s2] sm:$0x1]
    %66 = vmatprep.subr.mxu0 0.0
    %67 = vmatpush1.msra.mxu0 %v49
    %68 = vmatprep.subr.mxu0 0.0
    %69 = vmatpush1.msra.mxu0 %v50
    %70 = vmatprep.subr.mxu0 0.0
    %71 = vmatpush1.msra.mxu0 %v51
    %72 = vmatprep.subr.mxu0 0.0
    %73 = vmatpush1.msra.mxu0 %v52
    %74 = vmatprep.subr.mxu0 0.0
    %75 = vmatpush1.msra.mxu0 %v53
    %76 = vmatprep.subr.mxu0 0.0
    %77 = vmatpush1.msra.mxu0 %v54
    %78 = vmatprep.subr.mxu0 0.0
    %79 = vmatpush1.msra.mxu0 %v55
    %80 = vmatprep.subr.mxu0 0.0
    %81 = vmatpush1.msra.mxu0 %v56
    %82 = vmatprep.subr.mxu0 0.0
    %83 = vmatpush1.msra.mxu0 %v57
    %84 = vmatprep.subr.mxu0 0.0
    %85 = vmatpush1.msra.mxu0 %v58
    %86 = vmatprep.subr.mxu0 0.0
    %87 = vmatpush1.msra.mxu0 %v59
    %88 = vmatprep.subr.mxu0 0.0
    %89 = vmatpush1.msra.mxu0 %v60
    %90 = vmatprep.subr.mxu0 0.0
    %91 = vmatpush1.msra.mxu0 %v61
    %92 = vmatprep.subr.mxu0 0.0
    %93 = vmatpush1.msra.mxu0 %v62
    %94 = vmatprep.subr.mxu0 0.0
    %95 = vmatpush1.msra.mxu0 %v63
    %96 = vmatprep.subr.mxu0 0.0
    %97 = vmatpush1.msra.mxu0 %v64
    %98 = vmatprep.subr.mxu0 0.0
    %99 = vmatpush1.msra.mxu0 0.0
    %100 = vmatprep.subr.mxu0 0.0
    %101 = vmatpush1.msra.mxu0 0.0
    %102 = vmatprep.subr.mxu0 0.0
    %103 = vmatpush1.msra.mxu0 0.0
    %104 = vmatprep.subr.mxu0 0.0
    %105 = vmatpush1.msra.mxu0 0.0
    %106 = vmatprep.subr.mxu0 0.0
    %107 = vmatpush1.msra.mxu0 0.0
    %108 = vmatprep.subr.mxu0 0.0
    %109 = vmatpush1.msra.mxu0 0.0
    %110 = vmatprep.subr.mxu0 0.0
    %111 = vmatpush1.msra.mxu0 0.0
    %112 = vmatprep.subr.mxu0 0.0
    %113 = vmatpush1.msra.mxu0 0.0
    %114 = vmatprep.subr.mxu0 0.0
    %115 = vmatpush1.msra.mxu0 0.0
    %116 = vmatprep.subr.mxu0 0.0
    %117 = vmatpush1.msra.mxu0 0.0
    %118 = vmatprep.subr.mxu0 0.0
    %119 = vmatpush1.msra.mxu0 0.0
    %120 = vmatprep.subr.mxu0 0.0
    %121 = vmatpush1.msra.mxu0 0.0
    %122 = vmatprep.subr.mxu0 0.0
    %123 = vmatpush1.msra.mxu0 0.0
    %124 = vmatprep.subr.mxu0 0.0
    %125 = vmatpush1.msra.mxu0 0.0
    %126 = vmatprep.subr.mxu0 0.0
    %127 = vmatpush1.msra.mxu0 0.0
    %128 = vmatprep.subr.mxu0 0.0
    %129 = vmatpush1.msra.mxu0 0.0
    %130 = vmatprep.mubr.f32.mxu0 0.0
    %131 = vmatmul.mubr.f32.gmra.mrb[0].mxu0 %v48
    %v132 = vpop.f32.mrb[0].mxu0
    %v133 = vadd.f32 0.0, %v132
    %v134 = vpop.f32.mrb[0].mxu0
    %135 = vdwg.mxu0
    %v136 = vxor.u32 %v133, 2147483648
    %v137 = vmul.f32 %v136, 1.442695
    %v138 = vpow.pop %v137
    %v139 = vadd.f32 %v138, 1.0
    %v140 = vrcp.pop %v139
    %v141 = vmul.f32 1.0, %v140
    %v143 = vlaneseq
    %v144 = vshrl.u32 %v143, 7
    %v145 = vsub.s32 0, %v144
    %v146 = vrot.slane %v65, %v145
    %v148 = vmul.f32 %v141, %v146
    %v149 = vld [vmem:[#allocation4] sm:$0xff]
    %v150 = vld [vmem:[#allocation4 + $0x8] sm:$0xff]
    %v151 = vld [vmem:[#allocation4 + $0x10] sm:$0xff]
    %v152 = vld [vmem:[#allocation4 + $0x18] sm:$0xff]
    %v153 = vld [vmem:[#allocation4 + $0x20] sm:$0xff]
    %v154 = vld [vmem:[#allocation4 + $0x28] sm:$0xff]
    %v155 = vld [vmem:[#allocation4 + $0x30] sm:$0xff]
    %v156 = vld [vmem:[#allocation4 + $0x38] sm:$0xff]
    %v157 = vld [vmem:[#allocation4 + $0x40] sm:$0xff]
    %v158 = vld [vmem:[#allocation4 + $0x48] sm:$0xff]
    %v159 = vld [vmem:[#allocation4 + $0x50] sm:$0xff]
    %v160 = vld [vmem:[#allocation4 + $0x58] sm:$0xff]
    %v161 = vld [vmem:[#allocation4 + $0x60] sm:$0xff]
    %v162 = vld [vmem:[#allocation4 + $0x68] sm:$0xff]
    %v163 = vld [vmem:[#allocation4 + $0x70] sm:$0xff]
    %v164 = vld [vmem:[#allocation4 + $0x78] sm:$0xff]
    %v165 = vld [vmem:[%s4] sm:$0x1]
    %166 = vmatprep.subr.mxu0 0.0
    %167 = vmatpush1.msra.mxu0 %v149
    %168 = vmatprep.subr.mxu0 0.0
    %169 = vmatpush1.msra.mxu0 %v150
    %170 = vmatprep.subr.mxu0 0.0
    %171 = vmatpush1.msra.mxu0 %v151
    %172 = vmatprep.subr.mxu0 0.0
    %173 = vmatpush1.msra.mxu0 %v152
    %174 = vmatprep.subr.mxu0 0.0
    %175 = vmatpush1.msra.mxu0 %v153
    %176 = vmatprep.subr.mxu0 0.0
    %177 = vmatpush1.msra.mxu0 %v154
    %178 = vmatprep.subr.mxu0 0.0
    %179 = vmatpush1.msra.mxu0 %v155
    %180 = vmatprep.subr.mxu0 0.0
    %181 = vmatpush1.msra.mxu0 %v156
    %182 = vmatprep.subr.mxu0 0.0
    %183 = vmatpush1.msra.mxu0 %v157
    %184 = vmatprep.subr.mxu0 0.0
    %185 = vmatpush1.msra.mxu0 %v158
    %186 = vmatprep.subr.mxu0 0.0
    %187 = vmatpush1.msra.mxu0 %v159
    %188 = vmatprep.subr.mxu0 0.0
    %189 = vmatpush1.msra.mxu0 %v160
    %190 = vmatprep.subr.mxu0 0.0
    %191 = vmatpush1.msra.mxu0 %v161
    %192 = vmatprep.subr.mxu0 0.0
    %193 = vmatpush1.msra.mxu0 %v162
    %194 = vmatprep.subr.mxu0 0.0
    %195 = vmatpush1.msra.mxu0 %v163
    %196 = vmatprep.subr.mxu0 0.0
    %197 = vmatpush1.msra.mxu0 %v164
    %198 = vmatprep.subr.mxu0 0.0
    %199 = vmatpush1.msra.mxu0 0.0
    %200 = vmatprep.subr.mxu0 0.0
    %201 = vmatpush1.msra.mxu0 0.0
    %202 = vmatprep.subr.mxu0 0.0
    %203 = vmatpush1.msra.mxu0 0.0
    %204 = vmatprep.subr.mxu0 0.0
    %205 = vmatpush1.msra.mxu0 0.0
    %206 = vmatprep.subr.mxu0 0.0
    %207 = vmatpush1.msra.mxu0 0.0
    %208 = vmatprep.subr.mxu0 0.0
    %209 = vmatpush1.msra.mxu0 0.0
    %210 = vmatprep.subr.mxu0 0.0
    %211 = vmatpush1.msra.mxu0 0.0
    %212 = vmatprep.subr.mxu0 0.0
    %213 = vmatpush1.msra.mxu0 0.0
    %214 = vmatprep.subr.mxu0 0.0
    %215 = vmatpush1.msra.mxu0 0.0
    %216 = vmatprep.subr.mxu0 0.0
    %217 = vmatpush1.msra.mxu0 0.0
    %218 = vmatprep.subr.mxu0 0.0
    %219 = vmatpush1.msra.mxu0 0.0
    %220 = vmatprep.subr.mxu0 0.0
    %221 = vmatpush1.msra.mxu0 0.0
    %222 = vmatprep.subr.mxu0 0.0
    %223 = vmatpush1.msra.mxu0 0.0
    %224 = vmatprep.subr.mxu0 0.0
    %225 = vmatpush1.msra.mxu0 0.0
    %226 = vmatprep.subr.mxu0 0.0
    %227 = vmatpush1.msra.mxu0 0.0
    %228 = vmatprep.subr.mxu0 0.0
    %229 = vmatpush1.msra.mxu0 0.0
    %230 = vmatprep.mubr.f32.mxu0 0.0
    %231 = vmatmul.mubr.f32.gmra.mrb[0].mxu0 %v148
    %v232 = vpop.f32.mrb[0].mxu0
    %v233 = vadd.f32 0.0, %v232
    %v234 = vpop.f32.mrb[0].mxu0
    %235 = vdwg.mxu0
    %v236 = vxor.u32 %v233, 2147483648
    %v237 = vmul.f32 %v236, 1.442695
    %v238 = vpow.pop %v237
    %v239 = vadd.f32 %v238, 1.0
    %v240 = vrcp.pop %v239
    %v241 = vmul.f32 1.0, %v240
    %v243 = vlaneseq
    %v244 = vshrl.u32 %v243, 7
    %v245 = vsub.s32 0, %v244
    %v246 = vrot.slane %v165, %v245
    %v248 = vmul.f32 %v241, %v246
    %249 = vst [vmem:[%s5] sm:$0xff] %v248
    // Predicated region
    $region30: #{fwd.1} parent=1 // pred_check
      _
    $region31: #{fwd.1} parent=1 // pred_check_branch
      %251 = sbr.rel (0) target = $region33
    $region32: #{fwd.1} parent=1 // pred_region
      _
    $region33: #{fwd.1} parent=1 // pred_fallthru
      _
    // Predicated region
    $region34: #{fwd.1} parent=1 // pred_check
      _
    $region35: #{fwd.1} parent=1 // pred_check_branch
      %253 = sbr.rel (0) target = $region37
    $region36: #{fwd.1} parent=1 // pred_region
      _
    $region37: #{fwd.1} parent=1 // pred_fallthru
      _
    %254 = vsyncpa [#allocation3], 1
    %255 = vsyncpa [#allocation5], 1

</llo_original>
